<compile_context>
chip_gen: v5e
topology: v5e:2x2
jax: 0.10.0
libtpu: 0.0.40
codegen_flags: <defaults>
</compile_context>

<pallas_src>
import jax
import jax.numpy as jnp
import numpy as np
from jax.experimental import pallas as pl
from jax.experimental.pallas import tpu as pltpu


def _round_up(x: int, m: int) -> int:
    return (x + m - 1) // m * m


def _pick_batch_tile(rows: int) -> int:
    """Batch-tile size for the grid.

    The kernel is launch/DMA bound at these layer sizes, so large tiles
    amortize per-grid-step overhead; but keep >= 2 grid steps when the batch
    allows so v7x's two TensorCores both get work on the 'parallel' axis.
    Even at 1024 rows the per-step VMEM footprint (double-buffered x/out
    tiles + resident padded weights) is ~2 MiB, far under every generation's
    VMEM limit, so no vmem_limit_bytes tweak is needed.
    """
    if rows <= 8:
        return 8
    return min(1024, _round_up(pl.cdiv(rows, 2), 8))


def qnetwork_kernel(x_ref, wt1_ref, b1_ref, wt2_ref, b2_ref, wt3_ref, b3_ref,
                    out_ref):
    # All three matmuls + ReLUs fused; intermediates never leave vregs/VMEM.
    # NOTE: dots use the MXU default precision while the pure-JAX reference
    # uses Precision.HIGHEST; at these magnitudes they agree to ~1e-4.
    h1 = jnp.dot(x_ref[...], wt1_ref[...], preferred_element_type=jnp.float32)
    h1 = jnp.maximum(h1 + b1_ref[...], 0.0)

    h2 = jnp.dot(h1.astype(wt2_ref.dtype), wt2_ref[...],
                 preferred_element_type=jnp.float32)
    h2 = jnp.maximum(h2 + b2_ref[...], 0.0)

    out = jnp.dot(h2.astype(wt3_ref.dtype), wt3_ref[...],
                  preferred_element_type=jnp.float32)
    out_ref[...] = (out + b3_ref[...]).astype(out_ref.dtype)


def make_qnetwork(w1, b1, w2, b2, w3, b3, param_dtype=jnp.float32):
    """Pre-lay-out parameters once; return a jitted forward(state) callable.

    PyTorch nn.Linear layout: w1 [128,S], b1 [128], w2 [64,128], b2 [64],
    w3 [A,64], b3 [A].
    """
    h1 = w1.shape[0]                     # 128
    h2 = w2.shape[0]                     # 64
    s = w1.shape[1]                      # state_size
    a = w3.shape[0]                      # action_size
    h2p = _round_up(h2, 128)             # lane-dense hidden2 width (128)
    a_pad = _round_up(a, 128)            # lane-dense output width (128)

    # Kernel-friendly layouts, computed once (hoisted off the per-call path).
    wt1 = jnp.asarray(w1.T, dtype=param_dtype)                       # [S, 128]
    wt2 = jnp.pad(jnp.asarray(w2.T, dtype=param_dtype),
                  ((0, 0), (0, h2p - h2)))                           # [128, 128]
    wt3 = jnp.pad(jnp.asarray(w3.T, dtype=param_dtype),
                  ((0, h2p - h2), (0, a_pad - a)))                   # [128, A_pad]
    b1r = jnp.asarray(b1, dtype=jnp.float32).reshape(1, h1)          # [1, 128]
    b2r = jnp.pad(jnp.asarray(b2, dtype=jnp.float32).reshape(1, h2),
                  ((0, 0), (0, h2p - h2)))                           # [1, 128]
    b3r = jnp.pad(jnp.asarray(b3, dtype=jnp.float32).reshape(1, a),
                  ((0, 0), (0, a_pad - a)))                          # [1, A_pad]

    @jax.jit
    def forward(state):
        # NOTE: grid/tile are derived from state.shape[0]; a new batch size
        # triggers a recompile (bucket batch sizes upstream if that matters).
        batch = state.shape[0]
        x = state.astype(param_dtype)

        # Pad only when the batch is not sublane-aligned; otherwise skip the
        # extra jnp.pad HBM pass and let Pallas handle a ragged last block
        # (OOB rows influence only their own discarded output rows).
        rows = _round_up(max(batch, 8), 8)
        if rows != batch:
            x = jnp.pad(x, ((0, rows - batch), (0, 0)))

        tb = _pick_batch_tile(rows)
        grid = (pl.cdiv(rows, tb),)

        out = pl.pallas_call(
            qnetwork_kernel,
            out_shape=jax.ShapeDtypeStruct((rows, a_pad), jnp.float32),
            grid=grid,
            in_specs=[
                # Only the state tile changes per grid step (pipelined).
                pl.BlockSpec((tb, s), lambda i: (i, 0)),
                # Weights/biases are grid-invariant (constant block index):
                # fetched once, revisited from the same VMEM buffer.
                pl.BlockSpec((s, h1), lambda i: (0, 0)),       # W1^T
                pl.BlockSpec((1, h1), lambda i: (0, 0)),       # b1
                pl.BlockSpec((h1, h2p), lambda i: (0, 0)),     # W2^T (N pad 128)
                pl.BlockSpec((1, h2p), lambda i: (0, 0)),      # b2   (padded)
                pl.BlockSpec((h2p, a_pad), lambda i: (0, 0)),  # W3^T (K,N pad)
                pl.BlockSpec((1, a_pad), lambda i: (0, 0)),    # b3   (padded)
            ],
            out_specs=pl.BlockSpec((tb, a_pad), lambda i: (i, 0)),
            compiler_params=pltpu.CompilerParams(
                dimension_semantics=("parallel",)),
        )(x, wt1, b1r, wt2, b2r, wt3, b3r)

        # Drop batch padding and lane-dense output padding.  Consumers that
        # can take the padded [rows, 128] Q-values directly save this slice.
        return out[:batch, :a]

    return forward


def qnetwork_ref(state, w1, b1, w2, b2, w3, b3):
    """Pure-JAX reference of QNetwork.forward."""
    hi = jax.lax.Precision.HIGHEST
    x = jnp.maximum(jnp.dot(state, w1.T, precision=hi) + b1, 0.0)
    x = jnp.maximum(jnp.dot(x, w2.T, precision=hi) + b2, 0.0)
    return jnp.dot(x, w3.T, precision=hi) + b3


if __name__ == "__main__":
    # Small shapes consistent with the traffic-signal RL module.
    STATE_SIZE, ACTION_SIZE = 16, 4

    key = jax.random.PRNGKey(0)
    ks, ks2, kw1, kb1, kw2, kb2, kw3, kb3 = jax.random.split(key, 8)

    def linear_init(kw, kb, fan_in, fan_out):
        # PyTorch nn.Linear default init: U(-1/sqrt(fan_in), 1/sqrt(fan_in)).
        bound = 1.0 / np.sqrt(fan_in)
        w = jax.random.uniform(kw, (fan_out, fan_in), minval=-bound,
                               maxval=bound, dtype=jnp.float32)
        b = jax.random.uniform(kb, (fan_out,), minval=-bound, maxval=bound,
                               dtype=jnp.float32)
        return w, b

    w1, b1 = linear_init(kw1, kb1, STATE_SIZE, 128)
    w2, b2 = linear_init(kw2, kb2, 128, 64)
    w3, b3 = linear_init(kw3, kb3, 64, ACTION_SIZE)

    qnet = make_qnetwork(w1, b1, w2, b2, w3, b3)

    # Case 1: sublane-aligned batch -> no wrapper pad, 2 parallel grid steps.
    state = jax.random.normal(ks, (32, STATE_SIZE), dtype=jnp.float32)
    out = jax.block_until_ready(qnet(state))
    ref = qnetwork_ref(state, w1, b1, w2, b2, w3, b3)
    np.testing.assert_allclose(np.asarray(out), np.asarray(ref),
                               rtol=1e-4, atol=1e-4)

    # Case 2: odd batch -> minimal pad to a multiple of 8 + ragged last block.
    state2 = jax.random.normal(ks2, (33, STATE_SIZE), dtype=jnp.float32)
    out2 = jax.block_until_ready(qnet(state2))
    ref2 = qnetwork_ref(state2, w1, b1, w2, b2, w3, b3)
    np.testing.assert_allclose(np.asarray(out2), np.asarray(ref2),
                               rtol=1e-4, atol=1e-4)

    print("KERNEL_OK")
</pallas_src>

<mosaic_0001>
module attributes {stable_mosaic.version = 11 : i64} {
  func.func @qnetwork_kernel(%arg0: i32, %arg1: memref<16x16xf32, #tpu.memory_space<vmem>>, %arg2: memref<16x128xf32, #tpu.memory_space<vmem>>, %arg3: memref<1x128xf32, #tpu.memory_space<vmem>>, %arg4: memref<128x128xf32, #tpu.memory_space<vmem>>, %arg5: memref<1x128xf32, #tpu.memory_space<vmem>>, %arg6: memref<128x128xf32, #tpu.memory_space<vmem>>, %arg7: memref<1x128xf32, #tpu.memory_space<vmem>>, %arg8: memref<16x128xf32, #tpu.memory_space<vmem>>) attributes {dimension_semantics = [#tpu.dimension_semantics<parallel>], iteration_bounds = array<i64: 2>, scalar_prefetch = 0 : i64, scratch_operands = 0 : i64, tpu.core_type = #tpu.core_type<tc>, window_params = [{transform_indices = @transform_0, window_bounds = array<i64: 16, 16>}, {pipeline_mode = #tpu.pipeline_mode<synchronous>, transform_indices = @transform_1, window_bounds = array<i64: 16, 128>}, {pipeline_mode = #tpu.pipeline_mode<synchronous>, transform_indices = @transform_2, window_bounds = array<i64: 1, 128>}, {pipeline_mode = #tpu.pipeline_mode<synchronous>, transform_indices = @transform_3, window_bounds = array<i64: 128, 128>}, {pipeline_mode = #tpu.pipeline_mode<synchronous>, transform_indices = @transform_4, window_bounds = array<i64: 1, 128>}, {pipeline_mode = #tpu.pipeline_mode<synchronous>, transform_indices = @transform_5, window_bounds = array<i64: 128, 128>}, {pipeline_mode = #tpu.pipeline_mode<synchronous>, transform_indices = @transform_6, window_bounds = array<i64: 1, 128>}, {transform_indices = @transform_7, window_bounds = array<i64: 16, 128>}]} {
    %c0 = arith.constant 0 : index
    %c0_0 = arith.constant 0 : index
    %0 = vector.load %arg1[%c0, %c0_0] : memref<16x16xf32, #tpu.memory_space<vmem>>, vector<16x16xf32>
    %c0_1 = arith.constant 0 : index
    %c0_2 = arith.constant 0 : index
    %1 = vector.load %arg2[%c0_1, %c0_2] : memref<16x128xf32, #tpu.memory_space<vmem>>, vector<16x128xf32>
    %cst = arith.constant dense<0.000000e+00> : vector<16x128xf32>
    %2 = tpu.matmul %0, %1, %cst {dimension_numbers = #tpu.dot_dimension_numbers<[1], [0], [0], [1], [0, 0, 1, 1], [], []>} : vector<16x16xf32>, vector<16x128xf32>, vector<16x128xf32> -> vector<16x128xf32>
    %c0_3 = arith.constant 0 : index
    %c0_4 = arith.constant 0 : index
    %3 = vector.load %arg3[%c0_3, %c0_4] : memref<1x128xf32, #tpu.memory_space<vmem>>, vector<1x128xf32>
    %4 = vector.broadcast %3 : vector<1x128xf32> to vector<16x128xf32>
    %5 = arith.addf %2, %4 : vector<16x128xf32>
    %cst_5 = arith.constant 0.000000e+00 : f32
    %6 = vector.broadcast %cst_5 : f32 to vector<16x128xf32>
    %7 = arith.maximumf %5, %6 : vector<16x128xf32>
    %c0_6 = arith.constant 0 : index
    %c0_7 = arith.constant 0 : index
    %8 = vector.load %arg4[%c0_6, %c0_7] : memref<128x128xf32, #tpu.memory_space<vmem>>, vector<128x128xf32>
    %cst_8 = arith.constant dense<0.000000e+00> : vector<16x128xf32>
    %9 = tpu.matmul %7, %8, %cst_8 {dimension_numbers = #tpu.dot_dimension_numbers<[1], [0], [0], [1], [0, 0, 1, 1], [], []>} : vector<16x128xf32>, vector<128x128xf32>, vector<16x128xf32> -> vector<16x128xf32>
    %c0_9 = arith.constant 0 : index
    %c0_10 = arith.constant 0 : index
    %10 = vector.load %arg5[%c0_9, %c0_10] : memref<1x128xf32, #tpu.memory_space<vmem>>, vector<1x128xf32>
    %11 = vector.broadcast %10 : vector<1x128xf32> to vector<16x128xf32>
    %12 = arith.addf %9, %11 : vector<16x128xf32>
    %cst_11 = arith.constant 0.000000e+00 : f32
    %13 = vector.broadcast %cst_11 : f32 to vector<16x128xf32>
    %14 = arith.maximumf %12, %13 : vector<16x128xf32>
    %c0_12 = arith.constant 0 : index
    %c0_13 = arith.constant 0 : index
    %15 = vector.load %arg6[%c0_12, %c0_13] : memref<128x128xf32, #tpu.memory_space<vmem>>, vector<128x128xf32>
    %cst_14 = arith.constant dense<0.000000e+00> : vector<16x128xf32>
    %16 = tpu.matmul %14, %15, %cst_14 {dimension_numbers = #tpu.dot_dimension_numbers<[1], [0], [0], [1], [0, 0, 1, 1], [], []>} : vector<16x128xf32>, vector<128x128xf32>, vector<16x128xf32> -> vector<16x128xf32>
    %c0_15 = arith.constant 0 : index
    %c0_16 = arith.constant 0 : index
    %17 = vector.load %arg7[%c0_15, %c0_16] : memref<1x128xf32, #tpu.memory_space<vmem>>, vector<1x128xf32>
    %18 = vector.broadcast %17 : vector<1x128xf32> to vector<16x128xf32>
    %19 = arith.addf %16, %18 : vector<16x128xf32>
    %c0_17 = arith.constant 0 : index
    %c0_18 = arith.constant 0 : index
    %20 = vector.load %arg8[%c0_17, %c0_18] : memref<16x128xf32, #tpu.memory_space<vmem>>, vector<16x128xf32>
    tpu.vector_store %arg8[%c0_17, %c0_18], %19 {strides = array<i32>} : memref<16x128xf32, #tpu.memory_space<vmem>>, vector<16x128xf32>,
    return
  }
  func.func @transform_0(%arg0: i32) -> (i32, i32) {
    %c0_i32 = arith.constant 0 : i32
    %c0_i32_0 = arith.constant 0 : i32
    return %arg0, %c0_i32 : i32, i32
  }
  func.func @transform_1(%arg0: i32) -> (i32, i32) {
    %c0_i32 = arith.constant 0 : i32
    %c0_i32_0 = arith.constant 0 : i32
    %c0_i32_1 = arith.constant 0 : i32
    return %c0_i32, %c0_i32_0 : i32, i32
  }
  func.func @transform_2(%arg0: i32) -> (i32, i32) {
    %c0_i32 = arith.constant 0 : i32
    %c0_i32_0 = arith.constant 0 : i32
    %c0_i32_1 = arith.constant 0 : i32
    return %c0_i32, %c0_i32_0 : i32, i32
  }
  func.func @transform_3(%arg0: i32) -> (i32, i32) {
    %c0_i32 = arith.constant 0 : i32
    %c0_i32_0 = arith.constant 0 : i32
    %c0_i32_1 = arith.constant 0 : i32
    return %c0_i32, %c0_i32_0 : i32, i32
  }
  func.func @transform_4(%arg0: i32) -> (i32, i32) {
    %c0_i32 = arith.constant 0 : i32
    %c0_i32_0 = arith.constant 0 : i32
    %c0_i32_1 = arith.constant 0 : i32
    return %c0_i32, %c0_i32_0 : i32, i32
  }
  func.func @transform_5(%arg0: i32) -> (i32, i32) {
    %c0_i32 = arith.constant 0 : i32
    %c0_i32_0 = arith.constant 0 : i32
    %c0_i32_1 = arith.constant 0 : i32
    return %c0_i32, %c0_i32_0 : i32, i32
  }
  func.func @transform_6(%arg0: i32) -> (i32, i32) {
    %c0_i32 = arith.constant 0 : i32
    %c0_i32_0 = arith.constant 0 : i32
    %c0_i32_1 = arith.constant 0 : i32
    return %c0_i32, %c0_i32_0 : i32, i32
  }
  func.func @transform_7(%arg0: i32) -> (i32, i32) {
    %c0_i32 = arith.constant 0 : i32
    %c0_i32_0 = arith.constant 0 : i32
    return %arg0, %c0_i32 : i32, i32
  }
}

</mosaic_0001>

<llo_original>
// kernel: forward.1
$region0: #{forward.1}
  #allocation0 [shape = 'u32[]', space=smem, size = 0x4, offset = 0x4, fixed_abs, tag = 'smem constant byte address 0x4 - core index']
  #allocation1 [shape = 'u32[72,128]{1,0:T(1,128)}', space=vmem, size = 0x9000, scoped, tag = 'internal scratch']
  %s0 = inlined_call_operand.vmem [shape: f32[32,16], index: 0, kind: input, shape index: {}]
  %s1 = inlined_call_operand.vmem [shape: f32[16,128], index: 1, kind: input, shape index: {}]
  %s2 = inlined_call_operand.vmem [shape: f32[1,128], index: 2, kind: input, shape index: {}]
  %s3 = inlined_call_operand.hbm [shape: f32[128,128], index: 3, kind: input, shape index: {}]
  %s4 = inlined_call_operand.vmem [shape: f32[1,128], index: 4, kind: input, shape index: {}]
  %s5 = inlined_call_operand.hbm [shape: f32[128,128], index: 5, kind: input, shape index: {}]
  %s6 = inlined_call_operand.vmem [shape: f32[1,128], index: 6, kind: input, shape index: {}]
  %s7 = inlined_call_operand.vmem [shape: f32[32,128], index: 7, kind: output, shape index: {}]
  %s8 = sld [smem:[#allocation0]]
  $region69: #{forward.1} parent=0
    _
  %s10 = ssub.s32 1, %s8
  %s11 = scalar_select 0, %s10, %s8
  $region1: #{forward.1} parent=0
    #allocation2 [shape = 'u8[65536]{0}', space=vmem, size = 0x10000, scoped, tag = 'input window, operand 3, single buffered']
    #allocation3 [shape = 's32[2]{0}', space=sflag, size = 0x8, scoped, tag = 'scoped memory for forward.1']
    #allocation4 [shape = 'u8[65536]{0}', space=vmem, size = 0x10000, scoped, tag = 'input window, operand 5, single buffered']
    #allocation5 [shape = 's32[1]{0}', space=sflag, size = 0x4, scoped, tag = 'scoped memory for forward.1']
    %12 = vsyncpa [#allocation3], 0
    %13 = vsyncpa [#allocation5], 0
    loop: start=0, step=1, limit=4
    $region2: #{forward.1} parent=1 // loop_pre_header
      _
    $region3: #{forward.1} parent=1 // loop_header
      %s15 = sphi 0, %s19
      %p16 = scmp.ge.s32.totalorder %s15, 4
      %s25 = sphi 0, %s27
      %s28 = sphi 0, %s25
      %s29 = sphi 0, %s28
      %s45 = sphi 0, %s29
      %s49 = sphi 0, %s49
      %s51 = sphi 0, %s49
      %s52 = sphi 0, %s51
      %s66 = sphi 0, %s52
      %s70 = sphi 0, %s70
      %s72 = sphi 0, %s70
      %s73 = sphi 0, %s72
      %s87 = sphi 0, %s73
      %s91 = sphi 0, %s91
      %s93 = sphi 0, %s91
      %s94 = sphi 0, %s93
      %s108 = sphi 0, %s94
      %s112 = sphi 0, %s112
      %s114 = sphi 0, %s112
      %s115 = sphi 0, %s114
      %s129 = sphi 0, %s115
      %s133 = sphi 0, %s133
      %s135 = sphi 0, %s133
      %s136 = sphi 0, %s135
      %s150 = sphi 0, %s136
      %s154 = sphi 0, %s154
      %s156 = sphi 0, %s154
      %s157 = sphi 0, %s156
      %s171 = sphi 0, %s157
      %s177 = sphi 0, %s179
      %s180 = sphi 0, %s177
      %s181 = sphi 0, %s180
      %s197 = sphi 0, %s181
    $region4: #{forward.1} parent=1 // loop_header_branch
      %18 = sbr.rel (%p16) target = $region8
    $region5: #{forward.1} parent=1 // loop_body
      %s20 = ssub.s32 %s15, 1
      %s21 = ssub.s32 %s15, 2
      %s22 = sadd.s32 %s15, 1
      %s23 = ssub.s32 %s15, %s22
      %p24 = scmp.eq.s32.totalorder %s23, 0
      %s26 = sadd.s32 %s25, 1
      %s27 = scalar_select %p24, %s25, %s26
      %p30 = pneg %p24
      %p31 = scmp.eq.s32.totalorder %s15, 1
      %p32 = por %p30, %p31
      %p33 = scmp.ne.s32.totalorder %s25, %s28
      %p34 = scmp.eq.s32.totalorder %s15, 0
      %p35 = por %p33, %p34
      %p36 = scmp.ne.s32.totalorder %s25, %s28
      %p37 = scmp.eq.s32.totalorder %s20, 1
      %p38 = por %p36, %p37
      %p39 = scmp.ne.s32.totalorder %s28, %s29
      %p40 = scmp.eq.s32.totalorder %s20, 0
      %p41 = por %p39, %p40
      %p42 = scmp.ne.s32.totalorder %s28, %s29
      %p43 = scmp.eq.s32.totalorder %s21, 1
      %p44 = por %p42, %p43
      %p46 = scmp.ne.s32.totalorder %s29, %s45
      %p47 = scmp.eq.s32.totalorder %s21, 0
      %p48 = por %p46, %p47
      %s50 = sadd.s32 %s49, 1
      %p53 = scmp.eq.s32.totalorder %s15, 1
      %p54 = scmp.ne.s32.totalorder %s49, %s51
      %p55 = scmp.eq.s32.totalorder %s15, 0
      %p56 = por %p54, %p55
      %p57 = scmp.ne.s32.totalorder %s49, %s51
      %p58 = scmp.eq.s32.totalorder %s20, 1
      %p59 = por %p57, %p58
      %p60 = scmp.ne.s32.totalorder %s51, %s52
      %p61 = scmp.eq.s32.totalorder %s20, 0
      %p62 = por %p60, %p61
      %p63 = scmp.ne.s32.totalorder %s51, %s52
      %p64 = scmp.eq.s32.totalorder %s21, 1
      %p65 = por %p63, %p64
      %p67 = scmp.ne.s32.totalorder %s52, %s66
      %p68 = scmp.eq.s32.totalorder %s21, 0
      %p69 = por %p67, %p68
      %s71 = sadd.s32 %s70, 1
      %p74 = scmp.eq.s32.totalorder %s15, 1
      %p75 = scmp.ne.s32.totalorder %s70, %s72
      %p76 = scmp.eq.s32.totalorder %s15, 0
      %p77 = por %p75, %p76
      %p78 = scmp.ne.s32.totalorder %s70, %s72
      %p79 = scmp.eq.s32.totalorder %s20, 1
      %p80 = por %p78, %p79
      %p81 = scmp.ne.s32.totalorder %s72, %s73
      %p82 = scmp.eq.s32.totalorder %s20, 0
      %p83 = por %p81, %p82
      %p84 = scmp.ne.s32.totalorder %s72, %s73
      %p85 = scmp.eq.s32.totalorder %s21, 1
      %p86 = por %p84, %p85
      %p88 = scmp.ne.s32.totalorder %s73, %s87
      %p89 = scmp.eq.s32.totalorder %s21, 0
      %p90 = por %p88, %p89
      %s92 = sadd.s32 %s91, 1
      %p95 = scmp.eq.s32.totalorder %s15, 1
      %p96 = scmp.ne.s32.totalorder %s91, %s93
      %p97 = scmp.eq.s32.totalorder %s15, 0
      %p98 = por %p96, %p97
      %p99 = scmp.ne.s32.totalorder %s91, %s93
      %p100 = scmp.eq.s32.totalorder %s20, 1
      %p101 = por %p99, %p100
      %p102 = scmp.ne.s32.totalorder %s93, %s94
      %p103 = scmp.eq.s32.totalorder %s20, 0
      %p104 = por %p102, %p103
      %p105 = scmp.ne.s32.totalorder %s93, %s94
      %p106 = scmp.eq.s32.totalorder %s21, 1
      %p107 = por %p105, %p106
      %p109 = scmp.ne.s32.totalorder %s94, %s108
      %p110 = scmp.eq.s32.totalorder %s21, 0
      %p111 = por %p109, %p110
      %s113 = sadd.s32 %s112, 1
      %p116 = scmp.eq.s32.totalorder %s15, 1
      %p117 = scmp.ne.s32.totalorder %s112, %s114
      %p118 = scmp.eq.s32.totalorder %s15, 0
      %p119 = por %p117, %p118
      %p120 = scmp.ne.s32.totalorder %s112, %s114
      %p121 = scmp.eq.s32.totalorder %s20, 1
      %p122 = por %p120, %p121
      %p123 = scmp.ne.s32.totalorder %s114, %s115
      %p124 = scmp.eq.s32.totalorder %s20, 0
      %p125 = por %p123, %p124
      %p126 = scmp.ne.s32.totalorder %s114, %s115
      %p127 = scmp.eq.s32.totalorder %s21, 1
      %p128 = por %p126, %p127
      %p130 = scmp.ne.s32.totalorder %s115, %s129
      %p131 = scmp.eq.s32.totalorder %s21, 0
      %p132 = por %p130, %p131
      %s134 = sadd.s32 %s133, 1
      %p137 = scmp.eq.s32.totalorder %s15, 1
      %p138 = scmp.ne.s32.totalorder %s133, %s135
      %p139 = scmp.eq.s32.totalorder %s15, 0
      %p140 = por %p138, %p139
      %p141 = scmp.ne.s32.totalorder %s133, %s135
      %p142 = scmp.eq.s32.totalorder %s20, 1
      %p143 = por %p141, %p142
      %p144 = scmp.ne.s32.totalorder %s135, %s136
      %p145 = scmp.eq.s32.totalorder %s20, 0
      %p146 = por %p144, %p145
      %p147 = scmp.ne.s32.totalorder %s135, %s136
      %p148 = scmp.eq.s32.totalorder %s21, 1
      %p149 = por %p147, %p148
      %p151 = scmp.ne.s32.totalorder %s136, %s150
      %p152 = scmp.eq.s32.totalorder %s21, 0
      %p153 = por %p151, %p152
      %s155 = sadd.s32 %s154, 1
      %p158 = scmp.eq.s32.totalorder %s15, 1
      %p159 = scmp.ne.s32.totalorder %s154, %s156
      %p160 = scmp.eq.s32.totalorder %s15, 0
      %p161 = por %p159, %p160
      %p162 = scmp.ne.s32.totalorder %s154, %s156
      %p163 = scmp.eq.s32.totalorder %s20, 1
      %p164 = por %p162, %p163
      %p165 = scmp.ne.s32.totalorder %s156, %s157
      %p166 = scmp.eq.s32.totalorder %s20, 0
      %p167 = por %p165, %p166
      %p168 = scmp.ne.s32.totalorder %s156, %s157
      %p169 = scmp.eq.s32.totalorder %s21, 1
      %p170 = por %p168, %p169
      %p172 = scmp.ne.s32.totalorder %s157, %s171
      %p173 = scmp.eq.s32.totalorder %s21, 0
      %p174 = por %p172, %p173
      %s175 = ssub.s32 %s15, %s22
      %p176 = scmp.eq.s32.totalorder %s175, 0
      %s178 = sadd.s32 %s177, 1
      %s179 = scalar_select %p176, %s177, %s178
      %p182 = pneg %p176
      %p183 = scmp.eq.s32.totalorder %s15, 1
      %p184 = por %p182, %p183
      %p185 = scmp.ne.s32.totalorder %s177, %s180
      %p186 = scmp.eq.s32.totalorder %s15, 0
      %p187 = por %p185, %p186
      %p188 = scmp.ne.s32.totalorder %s177, %s180
      %p189 = scmp.eq.s32.totalorder %s20, 1
      %p190 = por %p188, %p189
      %p191 = scmp.ne.s32.totalorder %s180, %s181
      %p192 = scmp.eq.s32.totalorder %s20, 0
      %p193 = por %p191, %p192
      %p194 = scmp.ne.s32.totalorder %s180, %s181
      %p195 = scmp.eq.s32.totalorder %s21, 1
      %p196 = por %p194, %p195
      %p198 = scmp.ne.s32.totalorder %s181, %s197
      %p199 = scmp.eq.s32.totalorder %s21, 0
      %p200 = por %p198, %p199
      %p201 = scmp.le.s32.totalorder 1, %s15
      %p202 = scmp.lt.s32.totalorder %s15, 3
      %p203 = pnand %p201, %p202
      %p204 = pneg %p203
      // Predicated region
      $region9: #{forward.1} parent=5 // pred_check
        _
      $region10: #{forward.1} parent=5 // pred_check_branch
        %206 = sbr.rel (%p203) target = $region12
      $region11: #{forward.1} parent=5 // pred_region
        %s207 = ssub.s32 %s15, 1
        // Predicated region
        $region13: #{forward.1} parent=11 // pred_check
          %p208 = pneg %p62
        $region14: #{forward.1} parent=11 // pred_check_branch
          %210 = sbr.rel (%p208) target = $region16
        $region15: #{forward.1} parent=11 // pred_region
          _
        $region16: #{forward.1} parent=11 // pred_fallthru
          _
        // Predicated region
        $region17: #{forward.1} parent=11 // pred_check
          %p211 = pneg %p83
        $region18: #{forward.1} parent=11 // pred_check_branch
          %213 = sbr.rel (%p211) target = $region20
        $region19: #{forward.1} parent=11 // pred_region
          _
        $region20: #{forward.1} parent=11 // pred_fallthru
          _
        // Predicated region
        $region21: #{forward.1} parent=11 // pred_check
          %p214 = pneg %p104
        $region22: #{forward.1} parent=11 // pred_check_branch
          %216 = sbr.rel (%p214) target = $region24
        $region23: #{forward.1} parent=11 // pred_region
          %218 = vsyncadd [#allocation3], 0
          %s219 = sshll.u32 %s3, 4
          %s220 = int_to_ptr.hbm [resolvable:$true] %s219
          %s221 = sshll.u32 [#allocation2], 4
          %s222 = int_to_ptr.vmem [resolvable:$true] %s221
          %227 = dma.hbm_to_vmem [thread:$0]  %s220, 2048, %s222, [#allocation3], 128, 128, 8
        $region24: #{forward.1} parent=11 // pred_fallthru
          _
        // Predicated region
        $region25: #{forward.1} parent=11 // pred_check
          %p228 = pneg %p125
        $region26: #{forward.1} parent=11 // pred_check_branch
          %230 = sbr.rel (%p228) target = $region28
        $region27: #{forward.1} parent=11 // pred_region
          _
        $region28: #{forward.1} parent=11 // pred_fallthru
          _
        // Predicated region
        $region29: #{forward.1} parent=11 // pred_check
          %p231 = pneg %p146
        $region30: #{forward.1} parent=11 // pred_check_branch
          %233 = sbr.rel (%p231) target = $region32
        $region31: #{forward.1} parent=11 // pred_region
          %235 = vsyncadd [#allocation5], 0
          %s236 = sshll.u32 %s5, 4
          %s237 = int_to_ptr.hbm [resolvable:$true] %s236
          %s238 = sshll.u32 [#allocation4], 4
          %s239 = int_to_ptr.vmem [resolvable:$true] %s238
          %244 = dma.hbm_to_vmem [thread:$0]  %s237, 2048, %s239, [#allocation5], 128, 128, 8
        $region32: #{forward.1} parent=11 // pred_fallthru
          _
        // Predicated region
        $region33: #{forward.1} parent=11 // pred_check
          %p245 = pneg %p167
        $region34: #{forward.1} parent=11 // pred_check_branch
          %247 = sbr.rel (%p245) target = $region36
        $region35: #{forward.1} parent=11 // pred_region
          _
        $region36: #{forward.1} parent=11 // pred_fallthru
          _
      $region12: #{forward.1} parent=5 // pred_fallthru
        _
      %p248 = scmp.lt.s32.totalorder %s15, 2
      // Predicated region
      $region37: #{forward.1} parent=5 // pred_check
        %p249 = pneg %p248
      $region38: #{forward.1} parent=5 // pred_check_branch
        %251 = sbr.rel (%p249) target = $region40
      $region39: #{forward.1} parent=5 // pred_region
        // Predicated region
        $region41: #{forward.1} parent=39 // pred_check
          %p252 = pneg %p35
        $region42: #{forward.1} parent=39 // pred_check_branch
          %254 = sbr.rel (%p252) target = $region44
        $region43: #{forward.1} parent=39 // pred_region
          %s255 = smul.u32 2, %s15
          %p256 = scmp.lt.s32.totalorder %s255, 3
          %s257 = scalar_select %p256, %s255, 3
          %s258 = smul.addr %s257, 8
          %s259 = scalar_lea.vmem %s0, %s258
          %s260 = smul.u32 2, %s15
        $region44: #{forward.1} parent=39 // pred_fallthru
          _
      $region40: #{forward.1} parent=5 // pred_fallthru
        _
      %p261 = scmp.le.s32.totalorder 1, %s15
      %p262 = scmp.lt.s32.totalorder %s15, 3
      %p263 = pnand %p261, %p262
      %p264 = pneg %p263
      // Predicated region
      $region45: #{forward.1} parent=5 // pred_check
        _
      $region46: #{forward.1} parent=5 // pred_check_branch
        %266 = sbr.rel (%p263) target = $region48
      $region47: #{forward.1} parent=5 // pred_region
        %s267 = ssub.s32 %s15, 1
        // Predicated region
        $region49: #{forward.1} parent=47 // pred_check
          %p268 = pneg %p104
        $region50: #{forward.1} parent=47 // pred_check_branch
          %270 = sbr.rel (%p268) target = $region52
        $region51: #{forward.1} parent=47 // pred_region
          %272 = dma.done [#allocation3], 2048
        $region52: #{forward.1} parent=47 // pred_fallthru
          _
        // Predicated region
        $region53: #{forward.1} parent=47 // pred_check
          %p273 = pneg %p146
        $region54: #{forward.1} parent=47 // pred_check_branch
          %275 = sbr.rel (%p273) target = $region56
        $region55: #{forward.1} parent=47 // pred_region
          %277 = dma.done [#allocation5], 2048
        $region56: #{forward.1} parent=47 // pred_fallthru
          _
        %s278 = smul.u32 2, %s20
        %p279 = scmp.lt.s32.totalorder %s278, 3
        %s280 = scalar_select %p279, %s278, 3
        %s281 = smul.addr %s280, 8
        %s282 = scalar_lea.vmem %s0, %s281
        %p283 = pneg %p41
        %p284 = pneg %p38
        %p285 = pneg %p62
        %p286 = pneg %p59
        %p287 = pneg %p83
        %p288 = pneg %p80
        %p289 = pneg %p104
        %p290 = pneg %p101
        %p291 = pneg %p125
        %p292 = pneg %p122
        %p293 = pneg %p146
        %p294 = pneg %p143
        %p295 = pneg %p167
        %p296 = pneg %p164
        %p297 = pneg %p193
        %p298 = pneg %p190
        %s299 = smul.u32 2, %s20
        %p300 = scmp.lt.s32.totalorder %s299, 3
        %s301 = scalar_select %p300, %s299, 3
        %s302 = smul.addr %s301, 8
        %s303 = scalar_lea.vmem %s7, %s302
        %s304 = smul.u32 2, %s20
        %p305 = scmp.lt.s32.totalorder %s304, 3
        %s306 = scalar_select %p305, %s304, 3
        %s307 = smul.addr %s306, 8
        %s308 = scalar_lea.vmem %s0, %s307
        %s309 = smul.u32 2, %s20
        %s310 = smul.u32 2, %s20
        %p311 = scmp.lt.s32.totalorder %s310, 3
        %s312 = scalar_select %p311, %s310, 3
        %s313 = smul.addr %s312, 8
        %s314 = scalar_lea.vmem %s7, %s313
        %s315 = smul.u32 2, %s20
        %v316 = vld [vmem:[%s308] sm:$0xff]
        %v317 = vld [vmem:[%s308 + $0x8] sm:$0xff]
        %v318 = vld [vmem:[%s1] sm:$0xff]
        %v319 = vld [vmem:[%s1 + $0x8] sm:$0xff]
        %v320 = vld [vmem:[%s2] sm:$0x1]
        %v322 = vperm.slane %v320, 0
        %vm324 = vcmask 130048
        %v326 = vsel %vm324, %v316, 0
        %v329 = vsel %vm324, %v317, 0
        %331 = vmatpush.msra.mxu0 0.0
        %332 = vmatpush.msra.mxu0 0.0
        %333 = vmatpush.msra.mxu0 0.0
        %334 = vmatpush.msra.mxu0 0.0
        %335 = vmatpush.msra.mxu0 0.0
        %336 = vmatpush.msra.mxu0 0.0
        %337 = vmatpush.msra.mxu0 0.0
        %338 = vmatpush.msra.mxu0 0.0
        %339 = vmatpush.msra.mxu0 0.0
        %340 = vmatpush.msra.mxu0 0.0
        %341 = vmatpush.msra.mxu0 0.0
        %342 = vmatpush.msra.mxu0 0.0
        %343 = vmatpush.msra.mxu0 0.0
        %344 = vmatpush.msra.mxu0 0.0
        %345 = vmatpush.msra.mxu0 %v319
        %346 = vmatpush.msra.mxu0 %v318
        %347 = vmatmul.f32.gmra.mxu0 %v326
        %v348 = vpop.f32.mrf.mxu0
        %v349 = vadd.f32 %v322, %v348
        %350 = vmatmul.f32.gmra.mxu0 %v329
        %v351 = vpop.f32.mrf.mxu0
        %v352 = vadd.f32 %v322, %v351
        %353 = vdwg.mxu0
        %v354 = vmax.f32 %v349, 0.0
        %v355 = vmax.f32 %v352, 0.0
        %v356 = vld [vmem:[#allocation2] sm:$0xff]
        %v357 = vld [vmem:[#allocation2 + $0x8] sm:$0xff]
        %v358 = vld [vmem:[#allocation2 + $0x10] sm:$0xff]
        %v359 = vld [vmem:[#allocation2 + $0x18] sm:$0xff]
        %v360 = vld [vmem:[#allocation2 + $0x20] sm:$0xff]
        %v361 = vld [vmem:[#allocation2 + $0x28] sm:$0xff]
        %v362 = vld [vmem:[#allocation2 + $0x30] sm:$0xff]
        %v363 = vld [vmem:[#allocation2 + $0x38] sm:$0xff]
        %v364 = vld [vmem:[#allocation2 + $0x40] sm:$0xff]
        %v365 = vld [vmem:[#allocation2 + $0x48] sm:$0xff]
        %v366 = vld [vmem:[#allocation2 + $0x50] sm:$0xff]
        %v367 = vld [vmem:[#allocation2 + $0x58] sm:$0xff]
        %v368 = vld [vmem:[#allocation2 + $0x60] sm:$0xff]
        %v369 = vld [vmem:[#allocation2 + $0x68] sm:$0xff]
        %v370 = vld [vmem:[#allocation2 + $0x70] sm:$0xff]
        %v371 = vld [vmem:[#allocation2 + $0x78] sm:$0xff]
        %v372 = vld [vmem:[%s4] sm:$0x1]
        %v374 = vperm.slane %v372, 0
        %376 = vmatpush.msra.mxu0 %v371
        %377 = vmatpush.msra.mxu0 %v370
        %378 = vmatpush.msra.mxu0 %v369
        %379 = vmatpush.msra.mxu0 %v368
        %380 = vmatpush.msra.mxu0 %v367
        %381 = vmatpush.msra.mxu0 %v366
        %382 = vmatpush.msra.mxu0 %v365
        %383 = vmatpush.msra.mxu0 %v364
        %384 = vmatpush.msra.mxu0 %v363
        %385 = vmatpush.msra.mxu0 %v362
        %386 = vmatpush.msra.mxu0 %v361
        %387 = vmatpush.msra.mxu0 %v360
        %388 = vmatpush.msra.mxu0 %v359
        %389 = vmatpush.msra.mxu0 %v358
        %390 = vmatpush.msra.mxu0 %v357
        %391 = vmatpush.msra.mxu0 %v356
        %392 = vmatmul.f32.gmra.mxu0 %v354
        %v393 = vpop.f32.mrf.mxu0
        %v394 = vadd.f32 %v374, %v393
        %395 = vmatmul.f32.gmra.mxu0 %v355
        %v396 = vpop.f32.mrf.mxu0
        %v397 = vadd.f32 %v374, %v396
        %398 = vdwg.mxu0
        %v399 = vmax.f32 %v394, 0.0
        %v400 = vmax.f32 %v397, 0.0
        %v401 = vld [vmem:[#allocation4] sm:$0xff]
        %v402 = vld [vmem:[#allocation4 + $0x8] sm:$0xff]
        %v403 = vld [vmem:[#allocation4 + $0x10] sm:$0xff]
        %v404 = vld [vmem:[#allocation4 + $0x18] sm:$0xff]
        %v405 = vld [vmem:[#allocation4 + $0x20] sm:$0xff]
        %v406 = vld [vmem:[#allocation4 + $0x28] sm:$0xff]
        %v407 = vld [vmem:[#allocation4 + $0x30] sm:$0xff]
        %v408 = vld [vmem:[#allocation4 + $0x38] sm:$0xff]
        %v409 = vld [vmem:[#allocation4 + $0x40] sm:$0xff]
        %v410 = vld [vmem:[#allocation4 + $0x48] sm:$0xff]
        %v411 = vld [vmem:[#allocation4 + $0x50] sm:$0xff]
        %v412 = vld [vmem:[#allocation4 + $0x58] sm:$0xff]
        %v413 = vld [vmem:[#allocation4 + $0x60] sm:$0xff]
        %v414 = vld [vmem:[#allocation4 + $0x68] sm:$0xff]
        %v415 = vld [vmem:[#allocation4 + $0x70] sm:$0xff]
        %v416 = vld [vmem:[#allocation4 + $0x78] sm:$0xff]
        %v417 = vld [vmem:[%s6] sm:$0x1]
        %v419 = vperm.slane %v417, 0
        %421 = vmatpush.msra.mxu0 %v416
        %422 = vmatpush.msra.mxu0 %v415
        %423 = vmatpush.msra.mxu0 %v414
        %424 = vmatpush.msra.mxu0 %v413
        %425 = vmatpush.msra.mxu0 %v412
        %426 = vmatpush.msra.mxu0 %v411
        %427 = vmatpush.msra.mxu0 %v410
        %428 = vmatpush.msra.mxu0 %v409
        %429 = vmatpush.msra.mxu0 %v408
        %430 = vmatpush.msra.mxu0 %v407
        %431 = vmatpush.msra.mxu0 %v406
        %432 = vmatpush.msra.mxu0 %v405
        %433 = vmatpush.msra.mxu0 %v404
        %434 = vmatpush.msra.mxu0 %v403
        %435 = vmatpush.msra.mxu0 %v402
        %436 = vmatpush.msra.mxu0 %v401
        %437 = vmatmul.f32.gmra.mxu0 %v399
        %v438 = vpop.f32.mrf.mxu0
        %v439 = vadd.f32 %v419, %v438
        %440 = vmatmul.f32.gmra.mxu0 %v400
        %v441 = vpop.f32.mrf.mxu0
        %v442 = vadd.f32 %v419, %v441
        %443 = vdwg.mxu0
        %444 = vst [vmem:[%s314] sm:$0xff] %v439
        %445 = vst [vmem:[%s314 + $0x8] sm:$0xff] %v442
        %s446 = smul.u32 2, %s20
        %p447 = scmp.lt.s32.totalorder %s446, 3
        %s448 = scalar_select %p447, %s446, 3
        %s449 = smul.addr %s448, 8
        %s450 = scalar_lea.vmem %s7, %s449
        // Predicated region
        $region57: #{forward.1} parent=47 // pred_check
          %p451 = pneg %p190
        $region58: #{forward.1} parent=47 // pred_check_branch
          %453 = sbr.rel (%p451) target = $region60
        $region59: #{forward.1} parent=47 // pred_region
          %s454 = smul.u32 2, %s20
        $region60: #{forward.1} parent=47 // pred_fallthru
          _
      $region48: #{forward.1} parent=5 // pred_fallthru
        _
      %p455 = scmp.le.s32.totalorder 2, %s15
      // Predicated region
      $region61: #{forward.1} parent=5 // pred_check
        %p456 = pneg %p455
      $region62: #{forward.1} parent=5 // pred_check_branch
        %458 = sbr.rel (%p456) target = $region64
      $region63: #{forward.1} parent=5 // pred_region
        %s459 = ssub.s32 %s15, 2
        // Predicated region
        $region65: #{forward.1} parent=63 // pred_check
          %p460 = pneg %p196
        $region66: #{forward.1} parent=63 // pred_check_branch
          %462 = sbr.rel (%p460) target = $region68
        $region67: #{forward.1} parent=63 // pred_region
          %s463 = smul.u32 2, %s21
          %p464 = scmp.lt.s32.totalorder %s463, 3
          %s465 = scalar_select %p464, %s463, 3
          %s466 = smul.addr %s465, 8
          %s467 = scalar_lea.vmem %s7, %s466
        $region68: #{forward.1} parent=63 // pred_fallthru
          _
      $region64: #{forward.1} parent=5 // pred_fallthru
        _
    $region6: #{forward.1} parent=1 // loop_footer
      %s19 = sadd.s32 1, %s15
    $region7: #{forward.1} parent=1 // loop_footer_branch
      %14 = sbr.rel target = $region3
    $region8: #{forward.1} parent=1 // loop_exit
      _
    %468 = vsyncpa [#allocation3], 1
    %s469 = scalar_lea.sflag [#allocation3], 1
    %470 = vsyncpa %s469, 1
    %471 = vsyncpa [#allocation5], 1

</llo_original>
